<compile_context>
chip_gen: v5e
topology: v5e:2x2
jax: 0.10.0
libtpu: 0.0.40
codegen_flags: <defaults>
</compile_context>

<pallas_src>
import jax
import jax.numpy as jnp
from jax import lax
from jax.experimental import pallas as pl
from jax.experimental.pallas import tpu as pltpu


def _round_up(x, m):
    return (x + m - 1) // m * m


def _vmem_capacity_bytes():
    try:
        return int(pltpu.get_tpu_info().vmem_capacity_bytes)
    except Exception:
        return 64 * 1024 * 1024  # conservative default (v7x per-TensorCore VMEM)


def _make_bilinear_kernel(flipped, w_contract_dim):
    """Kernel producing one output tile of E1 @ W @ E2^T.

    Grid = (col_split, A-row-tile, B-row-tile); the B axis is innermost/sequential.
    M = A_tile @ W (or A_tile @ W^T when `flipped`) is computed once per A tile
    (when the B index restarts at 0), cached in VMEM scratch and reused for every
    B tile, so B is streamed from HBM exactly once per A row tile.
    """

    def kernel(a_ref, w_ref, b_ref, o_ref, m_ref):
        @pl.when(pl.program_id(2) == 0)
        def _():
            m_ref[...] = lax.dot_general(
                a_ref[...], w_ref[...],
                dimension_numbers=(((1,), (w_contract_dim,)), ((), ())),
                preferred_element_type=jnp.float32,
            ).astype(m_ref.dtype)

        if flipped:
            # (tn, tm) = B_tile @ M^T : output already in (n1, n2) orientation.
            acc = lax.dot_general(
                b_ref[...], m_ref[...],
                dimension_numbers=(((1,), (1,)), ((), ())),
                preferred_element_type=jnp.float32)
        else:
            # (tm, tn) = M @ B_tile^T (NT form; no in-kernel transpose of B).
            acc = lax.dot_general(
                m_ref[...], b_ref[...],
                dimension_numbers=(((1,), (1,)), ((), ())),
                preferred_element_type=jnp.float32)
        o_ref[...] = acc.astype(o_ref.dtype)

    return kernel


def cost_matrix_forward(embedding_1, embedding_2, weight_matrix, *,
                        operand_dtype=jnp.bfloat16, out_dtype=None,
                        tn=512, tm_max=None, col_splits=1):
    """Pallas equivalent of CostMatrixModule.forward.

    embedding_1: (n1, d), embedding_2: (n2, d), weight_matrix: (d, d)
    returns: (n1, n2) = embedding_1 @ weight_matrix @ embedding_2^T

    operand_dtype: bf16 by default (MXU fast path, f32 accumulation; the A@W
        intermediate is re-rounded to bf16). Pass jnp.float32 for full precision.
    out_dtype:     output dtype (default: result_type of the inputs, usually f32).
    tn:            B row tile (output lane tile), rounded to a 128 multiple.
    tm_max:        optional cap on the resident A row tile (forces the tiled path).
    col_splits:    set to 2 on v7x to shard the B sweep across both TensorCores
                   (uses pltpu.CORE_PARALLEL); leave at 1 on v5e/v6e.
    """
    n1, d1 = embedding_1.shape
    n2, d2 = embedding_2.shape
    dw0, dw1 = weight_matrix.shape
    assert d1 == d2 == dw0 == dw1, "feature dims must all equal d"
    d = d1

    if out_dtype is None:
        out_dtype = jnp.result_type(embedding_1.dtype, embedding_2.dtype,
                                    weight_matrix.dtype)
    out_dtype = jnp.dtype(out_dtype)
    op_dtype = jnp.dtype(operand_dtype)

    # Association: the smaller embedding (A) goes through the d x d product and is
    # kept resident; the larger one (B) is streamed.  Output stays in (n1, n2)
    # orientation for both branches (no external transpose); W^T is folded into the
    # first dot_general on the flipped branch (no HBM copy of W^T).
    flipped = n1 > n2
    a, b = (embedding_2, embedding_1) if flipped else (embedding_1, embedding_2)
    na, nb = a.shape[0], b.shape[0]

    a = a.astype(op_dtype)
    w = weight_matrix.astype(op_dtype)
    b = b.astype(op_dtype)

    # Zero-pad only the contraction axis (required for correctness); row axes are
    # never padded -- ragged edges are handled by partial blocks whose out-of-range
    # results fall outside the (n1, n2) output and are discarded.
    dp = _round_up(d, 128)
    if dp != d:
        a = jnp.pad(a, ((0, 0), (0, dp - d)))
        w = jnp.pad(w, ((0, dp - d), (0, dp - d)))
        b = jnp.pad(b, ((0, 0), (0, dp - d)))

    op_b = op_dtype.itemsize
    out_b = out_dtype.itemsize

    # B row tile: lane-dense 128-multiple, rounded unconditionally and clamped.
    if nb < 128:
        tn = nb                              # tiny problem: full-extent column block
    else:
        tn = max(128, _round_up(min(int(tn), _round_up(nb, 128)), 128))

    vmem_cap = _vmem_capacity_bytes()
    vmem_budget = int(0.80 * vmem_cap)

    def footprint(tm, a_bufs):
        # A bufs + W (single-buffered) + B (double) + out blocks (double) + M scratch.
        return ((a_bufs * tm + dp + 2 * tn) * dp * op_b
                + 2 * tm * tn * out_b
                + tm * dp * op_b)

    tm_cap = _round_up(na, 128)
    if tm_max is not None:
        tm_cap = min(tm_cap, max(128, _round_up(int(tm_max), 128)))

    if tm_cap >= na and footprint(na, 1) <= vmem_budget:
        # Whole small-side embedding (and M = A @ W) resident; B streamed once.
        tm, a_bufs = na, 1
    else:
        # Tiled fallback: A row tiles are 128-multiples (keeps the flipped-path
        # output block lane-aligned).  B is re-streamed once per A row tile.
        tm = tm_cap
        while tm > 128 and footprint(tm, 2) > vmem_budget:
            tm -= 128
        a_bufs = 2

    ni = pl.cdiv(na, tm)
    nj_total = pl.cdiv(nb, tn)
    nj = pl.cdiv(nj_total, max(1, int(col_splits)))
    grid = (max(1, int(col_splits)), ni, nj)

    if a_bufs == 1:
        a_spec = pl.BlockSpec((tm, dp), lambda c, i, j: (i, 0),
                              pipeline_mode=pl.Buffered(1))
    else:
        a_spec = pl.BlockSpec((tm, dp), lambda c, i, j: (i, 0))
    # W never changes across the grid -> single buffer (saves dp*dp*itemsize VMEM).
    w_spec = pl.BlockSpec((dp, dp), lambda c, i, j: (0, 0),
                          pipeline_mode=pl.Buffered(1))
    b_spec = pl.BlockSpec((tn, dp), lambda c, i, j: (c * nj + j, 0))

    if flipped:
        out_spec = pl.BlockSpec((tn, tm), lambda c, i, j: (c * nj + j, i))
    else:
        out_spec = pl.BlockSpec((tm, tn), lambda c, i, j: (i, c * nj + j))

    c_sem = pltpu.CORE_PARALLEL if col_splits > 1 else "parallel"
    vmem_limit = max(int(1.25 * footprint(tm, a_bufs)) + (2 << 20), 32 << 20)
    vmem_limit = min(vmem_limit, int(0.95 * vmem_cap))

    csp = max(1, int(col_splits))
    flops = int(2 * csp * ni * tm * dp * dp + 2 * csp * ni * nj * tm * tn * dp)
    bytes_accessed = int(
        (csp * ni * tm * dp          # A reads (once per (core-split, row tile))
         + dp * dp                   # W read once (single-buffered, resident)
         + csp * ni * nj * tn * dp   # B re-streamed once per A row tile
         ) * op_b
        + n1 * n2 * out_b)           # output writes

    kernel = _make_bilinear_kernel(flipped, 1 if flipped else 0)

    out = pl.pallas_call(
        kernel,
        out_shape=jax.ShapeDtypeStruct((n1, n2), out_dtype),
        grid=grid,
        in_specs=[a_spec, w_spec, b_spec],
        out_specs=out_spec,
        scratch_shapes=[pltpu.VMEM((tm, dp), op_dtype)],   # cached M = A_tile @ W
        compiler_params=pltpu.CompilerParams(
            dimension_semantics=(c_sem, "parallel", "arbitrary"),
            vmem_limit_bytes=vmem_limit),
        cost_estimate=pl.CostEstimate(
            flops=flops, transcendentals=0, bytes_accessed=bytes_accessed),
    )(a, w, b)
    return out


def init_weight_matrix(key, d, dtype=jnp.float32):
    # torch.nn.init.xavier_uniform_ on (d, d): bound = sqrt(6/(d+d)) = sqrt(3/d)
    bound = float(jnp.sqrt(3.0 / d))
    return jax.random.uniform(key, (d, d), dtype=dtype, minval=-bound, maxval=bound)


def _reference(e1, e2, w):
    m = jnp.dot(e1.astype(jnp.float32), w.astype(jnp.float32),
                precision=lax.Precision.HIGHEST)
    return jnp.dot(m, e2.astype(jnp.float32).T, precision=lax.Precision.HIGHEST)


def _rel_err(out, ref):
    out = out.astype(jnp.float32)
    ref = ref.astype(jnp.float32)
    return float(jnp.max(jnp.abs(out - ref)) / (jnp.max(jnp.abs(ref)) + 1e-6))


if __name__ == "__main__":
    key = jax.random.PRNGKey(0)
    k_w, k_e1, k_e2, k_w2, k_a, k_b, k_w3, k_c, k_d = jax.random.split(key, 9)

    # Case 1: n1 > n2 (flipped association, W^T folded in-kernel), bf16 fast path.
    d = 32
    n1, n2 = 16, 8
    w = init_weight_matrix(k_w, d)
    e1 = jax.random.normal(k_e1, (n1, d), dtype=jnp.float32)
    e2 = jax.random.normal(k_e2, (n2, d), dtype=jnp.float32)
    out = jax.block_until_ready(cost_matrix_forward(e1, e2, w))
    ref = _reference(e1, e2, w)
    assert out.shape == (n1, n2) and out.dtype == jnp.float32
    assert _rel_err(out, ref) < 0.05, "case 1 (flipped, bf16) mismatch"

    # Case 2: n1 < n2 (direct association), bf16 fast path.
    out2 = jax.block_until_ready(cost_matrix_forward(e2, e1, w))
    ref2 = _reference(e2, e1, w)
    assert out2.shape == (n2, n1)
    assert _rel_err(out2, ref2) < 0.05, "case 2 (direct, bf16) mismatch"

    # Case 3: f32 precision fallback; unaligned d (48 -> padded to 128), ragged row
    # counts, several lane-dense column tiles (tn=128 over nb=300), resident A.
    d3, n1_3, n2_3 = 48, 40, 300
    w3 = init_weight_matrix(k_w2, d3)
    a3 = jax.random.normal(k_a, (n1_3, d3), dtype=jnp.float32)
    b3 = jax.random.normal(k_b, (n2_3, d3), dtype=jnp.float32)
    out3 = jax.block_until_ready(
        cost_matrix_forward(a3, b3, w3, operand_dtype=jnp.float32, tn=128))
    ref3 = _reference(a3, b3, w3)
    assert out3.shape == (n1_3, n2_3)
    assert jnp.allclose(out3, ref3, atol=1e-3, rtol=1e-3), "case 3 (f32) mismatch"

    # Case 4: tiled fallback (resident path disabled via tm_max), flipped
    # orientation, ragged edge A row tile, multi-tile grid, bf16 operands.
    d4, n1_4, n2_4 = 128, 384, 260
    w4 = init_weight_matrix(k_w3, d4)
    e1_4 = jax.random.normal(k_c, (n1_4, d4), dtype=jnp.float32)
    e2_4 = jax.random.normal(k_d, (n2_4, d4), dtype=jnp.float32)
    out4 = jax.block_until_ready(
        cost_matrix_forward(e1_4, e2_4, w4, tm_max=128, tn=128))
    ref4 = _reference(e1_4, e2_4, w4)
    assert out4.shape == (n1_4, n2_4)
    assert _rel_err(out4, ref4) < 0.05, "case 4 (tiled fallback) mismatch"

    # Case 5: bf16 output dtype option (halves output HBM traffic).
    out5 = jax.block_until_ready(
        cost_matrix_forward(e1, e2, w, out_dtype=jnp.bfloat16))
    assert out5.shape == (n1, n2) and out5.dtype == jnp.bfloat16
    assert _rel_err(out5, ref) < 0.06, "case 5 (bf16 out) mismatch"

    print("KERNEL_OK")
</pallas_src>

<mosaic_0001>
module attributes {stable_mosaic.version = 11 : i64} {
  func.func @kernel(%arg0: i32, %arg1: i32, %arg2: i32, %arg3: memref<8x128xbf16, #tpu.memory_space<vmem>>, %arg4: memref<128x128xbf16, #tpu.memory_space<vmem>>, %arg5: memref<16x128xbf16, #tpu.memory_space<vmem>>, %arg6: memref<16x8xf32, #tpu.memory_space<vmem>>, %arg7: memref<8x128xbf16, #tpu.memory_space<vmem>>) attributes {dimension_semantics = [#tpu.dimension_semantics<parallel>, #tpu.dimension_semantics<parallel>, #tpu.dimension_semantics<arbitrary>], iteration_bounds = array<i64: 1, 1, 1>, scalar_prefetch = 0 : i64, scratch_operands = 1 : i64, tpu.core_type = #tpu.core_type<tc>, window_params = [{pipeline_mode = #tpu.pipeline_mode<synchronous>, transform_indices = @transform_0, window_bounds = array<i64: 8, 128>}, {pipeline_mode = #tpu.pipeline_mode<synchronous>, transform_indices = @transform_1, window_bounds = array<i64: 128, 128>}, {transform_indices = @transform_2, window_bounds = array<i64: 16, 128>}, {transform_indices = @transform_3, window_bounds = array<i64: 16, 8>}]} {
    %c0_i32 = arith.constant 0 : i32
    %0 = arith.cmpi eq, %arg2, %c0_i32 : i32
    %1 = arith.extui %0 : i1 to i32
    %c0_i32_0 = arith.constant 0 : i32
    %2 = arith.cmpi ne, %1, %c0_i32_0 : i32
    scf.if %2 {
      %c0_6 = arith.constant 0 : index
      %c0_7 = arith.constant 0 : index
      %7 = vector.load %arg3[%c0_6, %c0_7] : memref<8x128xbf16, #tpu.memory_space<vmem>>, vector<8x128xbf16>
      %c0_8 = arith.constant 0 : index
      %c0_9 = arith.constant 0 : index
      %8 = vector.load %arg4[%c0_8, %c0_9] : memref<128x128xbf16, #tpu.memory_space<vmem>>, vector<128x128xbf16>
      %cst_10 = arith.constant dense<0.000000e+00> : vector<8x128xf32>
      %9 = tpu.matmul %7, %8, %cst_10 {dimension_numbers = #tpu.dot_dimension_numbers<[1], [1], [0], [0], [0, 0, 1, 0], [], []>} : vector<8x128xbf16>, vector<128x128xbf16>, vector<8x128xf32> -> vector<8x128xf32>
      %10 = arith.truncf %9 : vector<8x128xf32> to vector<8x128xbf16>
      %c0_11 = arith.constant 0 : index
      %c0_12 = arith.constant 0 : index
      %11 = vector.load %arg7[%c0_11, %c0_12] : memref<8x128xbf16, #tpu.memory_space<vmem>>, vector<8x128xbf16>
      tpu.vector_store %arg7[%c0_11, %c0_12], %10 {strides = array<i32>} : memref<8x128xbf16, #tpu.memory_space<vmem>>, vector<8x128xbf16>,
    } else {
    }
    %c0 = arith.constant 0 : index
    %c0_1 = arith.constant 0 : index
    %3 = vector.load %arg5[%c0, %c0_1] : memref<16x128xbf16, #tpu.memory_space<vmem>>, vector<16x128xbf16>
    %c0_2 = arith.constant 0 : index
    %c0_3 = arith.constant 0 : index
    %4 = vector.load %arg7[%c0_2, %c0_3] : memref<8x128xbf16, #tpu.memory_space<vmem>>, vector<8x128xbf16>
    %cst = arith.constant dense<0.000000e+00> : vector<16x8xf32>
    %5 = tpu.matmul %3, %4, %cst {dimension_numbers = #tpu.dot_dimension_numbers<[1], [1], [0], [0], [0, 0, 1, 0], [], []>} : vector<16x128xbf16>, vector<8x128xbf16>, vector<16x8xf32> -> vector<16x8xf32>
    %c0_4 = arith.constant 0 : index
    %c0_5 = arith.constant 0 : index
    %6 = vector.load %arg6[%c0_4, %c0_5] : memref<16x8xf32, #tpu.memory_space<vmem>>, vector<16x8xf32>
    tpu.vector_store %arg6[%c0_4, %c0_5], %5 {strides = array<i32>} : memref<16x8xf32, #tpu.memory_space<vmem>>, vector<16x8xf32>,
    return
  }
  func.func @transform_0(%arg0: i32, %arg1: i32, %arg2: i32) -> (i32, i32) {
    %c0_i32 = arith.constant 0 : i32
    %c0_i32_0 = arith.constant 0 : i32
    return %arg1, %c0_i32 : i32, i32
  }
  func.func @transform_1(%arg0: i32, %arg1: i32, %arg2: i32) -> (i32, i32) {
    %c0_i32 = arith.constant 0 : i32
    %c0_i32_0 = arith.constant 0 : i32
    %c0_i32_1 = arith.constant 0 : i32
    return %c0_i32, %c0_i32_0 : i32, i32
  }
  func.func @transform_2(%arg0: i32, %arg1: i32, %arg2: i32) -> (i32, i32) {
    %c1_i32 = arith.constant 1 : i32
    %0 = arith.muli %arg0, %c1_i32 : i32
    %1 = arith.addi %0, %arg2 : i32
    %c0_i32 = arith.constant 0 : i32
    %c0_i32_0 = arith.constant 0 : i32
    return %1, %c0_i32 : i32, i32
  }
  func.func @transform_3(%arg0: i32, %arg1: i32, %arg2: i32) -> (i32, i32) {
    %c1_i32 = arith.constant 1 : i32
    %0 = arith.muli %arg0, %c1_i32 : i32
    %1 = arith.addi %0, %arg2 : i32
    %c0_i32 = arith.constant 0 : i32
    return %1, %arg1 : i32, i32
  }
}

</mosaic_0001>

<llo_original>
// kernel: tpu_custom_call.1
$region0: #{tpu_custom_call.1}
  #allocation0 [shape = 'u32[]', space=smem, size = 0x4, offset = 0x4, fixed_abs, tag = 'smem constant byte address 0x4 - core index']
  #allocation1 [shape = 'u32[72,128]{1,0:T(1,128)}', space=vmem, size = 0x9000, scoped, tag = 'internal scratch']
  #allocation2 [shape = 'bf16[8,128]{1,0:T(8,128)(2,1)}', space=vmem, size = 0x800, scoped, tag = 'scratch operand']
  %s0 = inlined_call_operand.hbm [shape: bf16[8,128], index: 0, kind: input, shape index: {}]
  %s1 = inlined_call_operand.hbm [shape: bf16[128,128], index: 1, kind: input, shape index: {}]
  %s2 = inlined_call_operand.hbm [shape: bf16[16,128], index: 2, kind: input, shape index: {}]
  %s3 = inlined_call_operand.vmem [shape: f32[16,8], index: 3, kind: output, shape index: {}]
  %s4 = sld [smem:[#allocation0]]
  $region38: #{tpu_custom_call.1} parent=0
    _
  %s6 = ssub.s32 1, %s4
  %s7 = scalar_select 0, %s6, %s4
  $region1: #{tpu_custom_call.1} parent=0
    #allocation3 [shape = 'u8[2048]{0}', space=vmem, size = 0x800, scoped, tag = 'input window, operand 0, single buffered']
    #allocation4 [shape = 's32[1]{0}', space=sflag, size = 0x4, scoped, tag = 'scoped memory for tpu_custom_call.1']
    #allocation5 [shape = 'u8[32768]{0}', space=vmem, size = 0x8000, scoped, tag = 'input window, operand 1, single buffered']
    #allocation6 [shape = 's32[1]{0}', space=sflag, size = 0x4, scoped, tag = 'scoped memory for tpu_custom_call.1']
    #allocation7 [shape = 'u8[4096]{0}', space=vmem, size = 0x1000, scoped, tag = 'input window, operand 2, single buffered']
    %8 = vsyncpa [#allocation4], 0
    %9 = vsyncpa [#allocation6], 0
    // Predicated region
    $region2: #{tpu_custom_call.1} parent=1 // pred_check
      _
    $region3: #{tpu_custom_call.1} parent=1 // pred_check_branch
      %11 = sbr.rel (0) target = $region5
    $region4: #{tpu_custom_call.1} parent=1 // pred_region
      %13 = vsyncadd [#allocation4], 0
      %s15 = sshll.u32 %s0, 4
      %s16 = int_to_ptr.hbm [resolvable:$true] %s15
      %s17 = sshll.u32 [#allocation3], 4
      %s18 = int_to_ptr.vmem [resolvable:$true] %s17
      %20 = dma.hbm_to_vmem [thread:$0]  %s16, 64, %s18, [#allocation4]
    $region5: #{tpu_custom_call.1} parent=1 // pred_fallthru
      _
    // Predicated region
    $region6: #{tpu_custom_call.1} parent=1 // pred_check
      _
    $region7: #{tpu_custom_call.1} parent=1 // pred_check_branch
      %22 = sbr.rel (0) target = $region9
    $region8: #{tpu_custom_call.1} parent=1 // pred_region
      %24 = vsyncadd [#allocation6], 0
      %s25 = sshll.u32 %s1, 4
      %s26 = int_to_ptr.hbm [resolvable:$true] %s25
      %s27 = sshll.u32 [#allocation5], 4
      %s28 = int_to_ptr.vmem [resolvable:$true] %s27
      %33 = dma.hbm_to_vmem [thread:$0]  %s26, 1024, %s28, [#allocation6], 64, 64, 4
    $region9: #{tpu_custom_call.1} parent=1 // pred_fallthru
      _
    // Predicated region
    $region10: #{tpu_custom_call.1} parent=1 // pred_check
      _
    $region11: #{tpu_custom_call.1} parent=1 // pred_check_branch
      %35 = sbr.rel (0) target = $region13
    $region12: #{tpu_custom_call.1} parent=1 // pred_region
      %s36 = sadd.s32 0, 0
      %s37 = smul.u32 2, %s36
      %39 = vsyncadd [#allocation6], 0
      %s40 = smul.addr %s37, 4
      %s41 = scalar_lea.hbm %s2, %s40
      %s42 = sshll.u32 %s41, 4
      %s43 = int_to_ptr.hbm [resolvable:$true] %s42
      %s44 = sshll.u32 [#allocation7], 4
      %s45 = int_to_ptr.vmem [resolvable:$true] %s44
      %50 = dma.hbm_to_vmem [thread:$0]  %s43, 128, %s45, [#allocation6], 64, 64, 4
    $region13: #{tpu_custom_call.1} parent=1 // pred_fallthru
      _
    // Predicated region
    $region14: #{tpu_custom_call.1} parent=1 // pred_check
      _
    $region15: #{tpu_custom_call.1} parent=1 // pred_check_branch
      %52 = sbr.rel (0) target = $region17
    $region16: #{tpu_custom_call.1} parent=1 // pred_region
      %54 = dma.done [#allocation4], 64
    $region17: #{tpu_custom_call.1} parent=1 // pred_fallthru
      _
    // Predicated region
    $region18: #{tpu_custom_call.1} parent=1 // pred_check
      _
    $region19: #{tpu_custom_call.1} parent=1 // pred_check_branch
      %56 = sbr.rel (0) target = $region21
    $region20: #{tpu_custom_call.1} parent=1 // pred_region
      %58 = dma.done [#allocation6], 1024
    $region21: #{tpu_custom_call.1} parent=1 // pred_fallthru
      _
    // Predicated region
    $region22: #{tpu_custom_call.1} parent=1 // pred_check
      _
    $region23: #{tpu_custom_call.1} parent=1 // pred_check_branch
      %60 = sbr.rel (0) target = $region25
    $region24: #{tpu_custom_call.1} parent=1 // pred_region
      %62 = dma.done [#allocation6], 128
    $region25: #{tpu_custom_call.1} parent=1 // pred_fallthru
      _
    %s63 = sadd.s32 0, 0
    %s64 = smul.u32 2, %s63
    %p65 = scmp.lt.s32.totalorder %s64, 1
    %s66 = scalar_select %p65, %s64, 1
    %s67 = smul.addr %s66, 8
    %s68 = scalar_lea.vmem %s3, %s67
    %s69 = sadd.s32 0, 0
    %s70 = smul.u32 2, %s69
    %s71 = sadd.s32 0, 0
    %s72 = smul.u32 2, %s71
    %p73 = scmp.lt.s32.totalorder %s72, 1
    %s74 = scalar_select %p73, %s72, 1
    %s75 = smul.addr %s74, 8
    %s76 = scalar_lea.vmem %s3, %s75
    %s77 = sadd.s32 0, 0
    %s78 = smul.u32 2, %s77
    %p80 = scmp.eq.s32.totalorder 0, 0
    // Predicated region
    $region26: #{tpu_custom_call.1} parent=1 // pred_check
      %p81 = pneg %p80
    $region27: #{tpu_custom_call.1} parent=1 // pred_check_branch
      %83 = sbr.rel (%p81) target = $region29
    $region28: #{tpu_custom_call.1} parent=1 // pred_region
      %v84 = vld [vmem:[#allocation3] sm:$0xf]
      %v85 = vld [vmem:[#allocation5] sm:$0xf]
      %v86 = vld [vmem:[#allocation5 + $0x4] sm:$0xf]
      %v87 = vld [vmem:[#allocation5 + $0x8] sm:$0xf]
      %v88 = vld [vmem:[#allocation5 + $0xc] sm:$0xf]
      %v89 = vld [vmem:[#allocation5 + $0x10] sm:$0xf]
      %v90 = vld [vmem:[#allocation5 + $0x14] sm:$0xf]
      %v91 = vld [vmem:[#allocation5 + $0x18] sm:$0xf]
      %v92 = vld [vmem:[#allocation5 + $0x1c] sm:$0xf]
      %v93 = vld [vmem:[#allocation5 + $0x20] sm:$0xf]
      %v94 = vld [vmem:[#allocation5 + $0x24] sm:$0xf]
      %v95 = vld [vmem:[#allocation5 + $0x28] sm:$0xf]
      %v96 = vld [vmem:[#allocation5 + $0x2c] sm:$0xf]
      %v97 = vld [vmem:[#allocation5 + $0x30] sm:$0xf]
      %v98 = vld [vmem:[#allocation5 + $0x34] sm:$0xf]
      %v99 = vld [vmem:[#allocation5 + $0x38] sm:$0xf]
      %v100 = vld [vmem:[#allocation5 + $0x3c] sm:$0xf]
      %v117 = vunpack.c.l.b16 %v85
      %v118 = vunpack.c.l.b16 %v86
      %v119 = vunpack.c.l.b16 %v87
      %v120 = vunpack.c.l.b16 %v88
      %v121 = vunpack.c.l.b16 %v89
      %v122 = vunpack.c.l.b16 %v90
      %v123 = vunpack.c.l.b16 %v91
      %v124 = vunpack.c.l.b16 %v92
      %v125 = vunpack.c.l.b16 %v93
      %v126 = vunpack.c.l.b16 %v94
      %v127 = vunpack.c.l.b16 %v95
      %v128 = vunpack.c.l.b16 %v96
      %v129 = vunpack.c.l.b16 %v97
      %v130 = vunpack.c.l.b16 %v98
      %v131 = vunpack.c.l.b16 %v99
      %v132 = vunpack.c.l.b16 %v100
      %v133 = vpack.c.b16 %v118, %v117
      %v134 = vpack.c.b16 %v120, %v119
      %v135 = vpack.c.b16 %v122, %v121
      %v136 = vpack.c.b16 %v124, %v123
      %v137 = vpack.c.b16 %v126, %v125
      %v138 = vpack.c.b16 %v128, %v127
      %v139 = vpack.c.b16 %v130, %v129
      %v140 = vpack.c.b16 %v132, %v131
      %149 = vmatpush.bf16.xpose.msra.mxu0 %v140
      %150 = vmatpush.bf16.xpose.msra.mxu0 %v139
      %151 = vmatpush.bf16.xpose.msra.mxu0 %v138
      %152 = vmatpush.bf16.xpose.msra.mxu0 %v137
      %153 = vmatpush.bf16.xpose.msra.mxu0 %v136
      %154 = vmatpush.bf16.xpose.msra.mxu0 %v135
      %155 = vmatpush.bf16.xpose.msra.mxu0 %v134
      %156 = vmatpush.bf16.xpose.msra.mxu0 %v133
      %157 = vmatmul.bf16.gmra.mxu0 %v84
      %v158 = vpop.f32.mrf.mxu0
      %v159 = vadd.f32 0.0, %v158
      %v160 = vpop.f32.mrf.mxu0
      %161 = vdwg.mxu0
      %v162 = vpack.c.bf16 %v159, %v159
      %163 = vst [vmem:[#allocation2] sm:$0xf] %v162
    $region29: #{tpu_custom_call.1} parent=1 // pred_fallthru
      _
    %v164 = vld [vmem:[#allocation7] sm:$0xf]
    %v165 = vld [vmem:[#allocation7 + $0x4] sm:$0xf]
    %v166 = vld [vmem:[#allocation2] sm:$0xf]
    %v169 = vunpack.c.l.b16 %v164
    %v170 = vunpack.c.l.b16 %v165
    %v171 = vpack.c.b16 %v170, %v169
    %173 = vmatpush.bf16.xpose.msra.mxu0 0
    %174 = vmatpush.bf16.xpose.msra.mxu0 0
    %175 = vmatpush.bf16.xpose.msra.mxu0 0
    %176 = vmatpush.bf16.xpose.msra.mxu0 0
    %177 = vmatpush.bf16.xpose.msra.mxu0 0
    %178 = vmatpush.bf16.xpose.msra.mxu0 0
    %179 = vmatpush.bf16.xpose.msra.mxu0 0
    %180 = vmatpush.bf16.xpose.msra.mxu0 %v166
    %181 = vmatmul.bf16.gmra.mxu0 %v171
    %v182 = vpop.f32.mrf.mxu0
    %v183 = vadd.f32 0.0, %v182
    %v184 = vpop.f32.mrf.mxu0
    %v185 = vadd.f32 0.0, %v184
    %186 = vdwg.mxu0
    %vm187 = vcmask 64512
    %188 = vst.msk [vmem:[%s76] sm:$0xff] %vm187, %v183
    %189 = vst.msk [vmem:[%s76 + $0x8] sm:$0xff] %vm187, %v185
    %s190 = sadd.s32 0, 0
    %s191 = smul.u32 2, %s190
    %p192 = scmp.lt.s32.totalorder %s191, 1
    %s193 = scalar_select %p192, %s191, 1
    %s194 = smul.addr %s193, 8
    %s195 = scalar_lea.vmem %s3, %s194
    // Predicated region
    $region30: #{tpu_custom_call.1} parent=1 // pred_check
      _
    $region31: #{tpu_custom_call.1} parent=1 // pred_check_branch
      %197 = sbr.rel (0) target = $region33
    $region32: #{tpu_custom_call.1} parent=1 // pred_region
      %s198 = sadd.s32 0, 0
      %s199 = smul.u32 2, %s198
    $region33: #{tpu_custom_call.1} parent=1 // pred_fallthru
      _
    // Predicated region
    $region34: #{tpu_custom_call.1} parent=1 // pred_check
      _
    $region35: #{tpu_custom_call.1} parent=1 // pred_check_branch
      %201 = sbr.rel (0) target = $region37
    $region36: #{tpu_custom_call.1} parent=1 // pred_region
      %s202 = sadd.s32 0, 0
      %s203 = smul.u32 2, %s202
      %p204 = scmp.lt.s32.totalorder %s203, 1
      %s205 = scalar_select %p204, %s203, 1
      %s206 = smul.addr %s205, 8
      %s207 = scalar_lea.vmem %s3, %s206
    $region37: #{tpu_custom_call.1} parent=1 // pred_fallthru
      _
    %208 = vsyncpa [#allocation4], 1
    %209 = vsyncpa [#allocation6], 1

</llo_original>
